<compile_context>
chip_gen: v7x
topology: tpu7x:2x2x1
jax: 0.10.0
libtpu: 0.0.40
codegen_flags: <defaults>
</compile_context>

<pallas_src>
import functools

import jax
import jax.numpy as jnp
from jax import lax
from jax.experimental import pallas as pl
from jax.experimental.pallas import tpu as pltpu

_LANE = 128      # vreg lane width
_SUBLANE = 8     # vreg sublane width


def _round_up(x, m):
    return ((x + m - 1) // m) * m


def _tiling(n, tile_rows):
    """Row tiling: large tiles (amortize grid-step overhead), >=2 tiles for v7x."""
    n_rows = _round_up(max(n, 1), _SUBLANE)
    tile = min(_round_up(tile_rows, _SUBLANE), n_rows)
    # v7x has 2 TensorCores; with a single grid step the second TC idles, so
    # split the rows into two tiles whenever that is possible.
    if tile == n_rows and n_rows >= 2 * _SUBLANE:
        tile = _round_up((n_rows + 1) // 2, _SUBLANE)
    num_tiles = pl.cdiv(n_rows, tile)
    n_pad = num_tiles * tile
    return tile, num_tiles, n_pad


def _gather_logits(ids, table_ref, tile_n, v_pad):
    """logits[n, :] = table[idx[n], :] done as a one-hot matmul on the MXU."""
    col = lax.broadcasted_iota(jnp.int32, (tile_n, v_pad), 1)   # lane index per row
    onehot = (ids == col).astype(jnp.float32)                   # (tile_n, v_pad)
    # TODO(synk): for a genuinely large vocab, replace the one-hot matmul with a
    # scalar-prefetch row gather (PrefetchScalarGridSpec + pl.Element) so the
    # lookup becomes pure DMA instead of MXU traffic; also pad V to 256 on
    # v6e/v7x to fill the 256x256 MXU tiles.
    logits = jnp.dot(onehot, table_ref[...], preferred_element_type=jnp.float32)
    return logits, col


def _loss_partial(it_ref, table_ref, tile_n, v_pad, n_valid, v_real):
    """Shared gather + stable cross-entropy partial sum for this row tile."""
    ids = it_ref[:, 0:1]                                        # (tile_n, 1) int32
    tgt = it_ref[:, 1:2]                                        # (tile_n, 1) int32
    logits, col = _gather_logits(ids, table_ref, tile_n, v_pad)

    # Stable logsumexp over the *real* vocab lanes only; padded lanes -> -1e30
    # so exp underflows to 0 (avoid -inf to keep 0*logit products NaN-free).
    lane_valid = col < v_real
    masked = jnp.where(lane_valid, logits, jnp.float32(-1e30))
    m = jnp.max(masked, axis=-1, keepdims=True)                 # (tile_n, 1)
    lse = jnp.log(jnp.sum(jnp.exp(masked - m), axis=-1, keepdims=True)) + m

    # Target logit via one-hot select (targets < v_real, padded-lane logits are 0).
    tgt_onehot = (tgt == col).astype(jnp.float32)               # (tile_n, v_pad)
    tgt_logit = jnp.sum(tgt_onehot * logits, axis=-1, keepdims=True)

    # Mask rows that are only padding; emit this tile's *sum* of losses. The
    # global mean (sum / N) is finished in the wrapper so the row-tile grid
    # axis stays "parallel" (no shared scalar accumulator across tiles).
    row = pl.program_id(0) * tile_n + lax.broadcasted_iota(jnp.int32, (tile_n, 1), 0)
    per_row = (lse - tgt_logit) * (row < n_valid).astype(jnp.float32)
    return logits, jnp.sum(per_row)


def _bigram_logits_kernel(it_ref, table_ref, logits_ref):
    """Logits-only path (target is None): no wasted loss math."""
    tile_n, v_pad = logits_ref.shape
    ids = it_ref[:, 0:1]
    logits, _ = _gather_logits(ids, table_ref, tile_n, v_pad)
    logits_ref[...] = logits                                    # lane-dense (tile_n, 128)


def _bigram_loss_kernel(it_ref, table_ref, logits_ref, loss_ref, *, n_valid, v_real):
    """Embedding gather + logits writeback + per-tile cross-entropy partial sum."""
    tile_n, v_pad = logits_ref.shape
    logits, part = _loss_partial(it_ref, table_ref, tile_n, v_pad, n_valid, v_real)
    logits_ref[...] = logits
    loss_ref[...] = jnp.full(loss_ref.shape, part, dtype=jnp.float32)


def _bigram_loss_only_kernel(it_ref, table_ref, loss_ref, *, n_valid, v_real, v_pad):
    """Loss-only path: skips the dominant HBM cost (padded logits writeback)."""
    tile_n = it_ref.shape[0]
    _, part = _loss_partial(it_ref, table_ref, tile_n, v_pad, n_valid, v_real)
    loss_ref[...] = jnp.full(loss_ref.shape, part, dtype=jnp.float32)


def bigram_forward(idx, table, target=None, *, tile_rows=1024, need_logits=True):
    """Mirrors BigramLanguageModel.forward: returns (logits, loss).

    need_logits=False (valid only with a target) skips logits materialization
    entirely and returns (None, loss) — the fast path for training steps.
    """
    B, T = idx.shape
    V = table.shape[-1]
    N = B * T

    v_pad = _round_up(V, _LANE)                       # 65 -> 128 (lane-dense stores)
    tile, num_tiles, n_pad = _tiling(N, tile_rows)

    # Table resident in VMEM (constant index_map); padded rows/cols are zeros.
    table_p = jnp.zeros((v_pad, v_pad), jnp.float32).at[:V, :V].set(
        table.astype(jnp.float32))

    # idx and target packed into a single (n_pad, 2) int32 array: one DMA per
    # tile and one padded VMEM buffer instead of two (tile, 1) streams.
    idx_flat = idx.reshape(N).astype(jnp.int32)
    tgt_flat = (jnp.zeros_like(idx_flat) if target is None
                else target.reshape(N).astype(jnp.int32))
    it = jnp.zeros((n_pad, 2), jnp.int32).at[:N, :].set(
        jnp.stack([idx_flat, tgt_flat], axis=1))

    cparams = pltpu.CompilerParams(
        dimension_semantics=("parallel",),            # row tiles independent (2 TCs on v7x)
        vmem_limit_bytes=32 * 1024 * 1024,            # fits v5e/v6e/v7x scoped VMEM
    )
    it_spec = pl.BlockSpec((tile, 2), lambda i: (i, 0))
    tbl_spec = pl.BlockSpec((v_pad, v_pad), lambda i: (0, 0))      # table resident
    logits_spec = pl.BlockSpec((tile, v_pad), lambda i: (i, 0))
    partial_spec = pl.BlockSpec((1, 1, _LANE), lambda i: (i, 0, 0))
    partial_shape = jax.ShapeDtypeStruct((num_tiles, 1, _LANE), jnp.float32)

    if target is None:
        logits_p = pl.pallas_call(
            _bigram_logits_kernel,
            grid=(num_tiles,),
            in_specs=[it_spec, tbl_spec],
            out_specs=logits_spec,
            out_shape=jax.ShapeDtypeStruct((n_pad, v_pad), jnp.float32),
            compiler_params=cparams,
        )(it, table_p)
        # NOTE: this slice is the only non-lane-dense pass; callers that can
        # consume 128-wide logits should use the padded output directly.
        return logits_p[:N, :V].reshape(B, T, V), None

    if not need_logits:
        kernel = functools.partial(_bigram_loss_only_kernel,
                                   n_valid=N, v_real=V, v_pad=v_pad)
        partials = pl.pallas_call(
            kernel,
            grid=(num_tiles,),
            in_specs=[it_spec, tbl_spec],
            out_specs=partial_spec,
            out_shape=partial_shape,
            compiler_params=cparams,
        )(it, table_p)
        loss = jnp.sum(partials[:, 0, 0]) / jnp.float32(N)
        return None, loss

    kernel = functools.partial(_bigram_loss_kernel, n_valid=N, v_real=V)
    logits_p, partials = pl.pallas_call(
        kernel,
        grid=(num_tiles,),
        in_specs=[it_spec, tbl_spec],
        out_specs=(logits_spec, partial_spec),
        out_shape=(
            jax.ShapeDtypeStruct((n_pad, v_pad), jnp.float32),
            partial_shape,
        ),
        compiler_params=cparams,
    )(it, table_p)

    logits = logits_p[:N, :V].reshape(B, T, V)
    loss = jnp.sum(partials[:, 0, 0]) / jnp.float32(N)
    return logits, loss


@functools.partial(jax.jit, static_argnames=("max_new_tokens",))
def generate(idx, table, key, max_new_tokens=4):
    """Autoregressive sampling. A (B, 1) bigram lookup is pure dispatch overhead
    for a Pallas launch, so the per-token step uses a plain XLA row gather inside
    one jitted fori_loop over a preallocated buffer (no concatenate retraces)."""
    B, T = idx.shape
    total = T + max_new_tokens
    buf = jnp.zeros((B, total), idx.dtype).at[:, :T].set(idx)

    def body(t, carry):
        buf, key = carry
        last = lax.dynamic_slice(buf, (0, t - 1), (B, 1))[:, 0]      # (B,)
        logits = table[last]                                         # (B, V) gather
        key, sub = jax.random.split(key)
        # TODO(synk): torch.multinomial replaced by jax.random.categorical
        # (same categorical sampling semantics, different RNG stream).
        nxt = jax.random.categorical(sub, logits, axis=-1).astype(buf.dtype)
        buf = lax.dynamic_update_slice(buf, nxt[:, None], (0, t))
        return buf, key

    buf, _ = lax.fori_loop(T, total, body, (buf, key))
    return buf


def _reference_forward(idx, table, target):
    """Pure-JAX reference for correctness checking."""
    logits = table[idx]                                      # (B, T, V)
    flat = logits.reshape(-1, logits.shape[-1])
    t = target.reshape(-1)
    lse = jax.nn.logsumexp(flat, axis=-1)
    tgt_logit = jnp.take_along_axis(flat, t[:, None], axis=-1)[:, 0]
    loss = jnp.mean(lse - tgt_logit)
    return logits, loss


if __name__ == "__main__":
    key = jax.random.PRNGKey(0)
    k_tab, k_idx, k_tgt, k_gen = jax.random.split(key, 4)

    vocab_size = 65          # e.g. len(set(text)) for a small char corpus
    B, T = 2, 8

    # nn.Embedding default init ~ N(0, 1)
    table = jax.random.normal(k_tab, (vocab_size, vocab_size), dtype=jnp.float32)
    idx = jax.random.randint(k_idx, (B, T), 0, vocab_size, dtype=jnp.int32)
    target = jax.random.randint(k_tgt, (B, T), 0, vocab_size, dtype=jnp.int32)

    # With target: (logits, loss)
    logits, loss = bigram_forward(idx, table, target)
    logits = jax.block_until_ready(logits)
    loss = jax.block_until_ready(loss)

    # Without target: (logits, None) — loss work fully gated out.
    logits_only, loss_none = bigram_forward(idx, table, None)
    logits_only = jax.block_until_ready(logits_only)
    assert loss_none is None

    # Loss-only fast path (training-step mode): no logits writeback at all.
    _, loss_fast = bigram_forward(idx, table, target, need_logits=False)
    loss_fast = jax.block_until_ready(loss_fast)

    ref_logits, ref_loss = _reference_forward(idx, table, target)
    assert logits.shape == (B, T, vocab_size) and logits.dtype == jnp.float32
    assert jnp.allclose(logits, ref_logits, atol=1e-4, rtol=1e-4)
    assert jnp.allclose(logits_only, ref_logits, atol=1e-4, rtol=1e-4)
    assert jnp.allclose(loss, ref_loss, atol=1e-4, rtol=1e-4)
    assert jnp.allclose(loss_fast, ref_loss, atol=1e-4, rtol=1e-4)

    # Generation (plain-gather sampling loop, no per-token kernel launch).
    gen = generate(idx, table, k_gen, max_new_tokens=4)
    gen = jax.block_until_ready(gen)
    assert gen.shape == (B, T + 4)
    assert bool(jnp.all((gen >= 0) & (gen < vocab_size)))
    assert bool(jnp.all(gen[:, :T] == idx))

    print("KERNEL_OK")
</pallas_src>

<mosaic_0001>
module attributes {stable_mosaic.version = 11 : i64} {
  func.func @_bigram_loss_kernel(%arg0: i32, %arg1: memref<8x2xi32, #tpu.memory_space<vmem>>, %arg2: memref<128x128xf32, #tpu.memory_space<vmem>>, %arg3: memref<8x128xf32, #tpu.memory_space<vmem>>, %arg4: memref<1x1x128xf32, #tpu.memory_space<vmem>>) attributes {dimension_semantics = [#tpu.dimension_semantics<parallel>], iteration_bounds = array<i64: 2>, scalar_prefetch = 0 : i64, scratch_operands = 0 : i64, tpu.core_type = #tpu.core_type<tc>, window_params = [{transform_indices = @transform_0, window_bounds = array<i64: 8, 2>}, {pipeline_mode = #tpu.pipeline_mode<synchronous>, transform_indices = @transform_1, window_bounds = array<i64: 128, 128>}, {transform_indices = @transform_2, window_bounds = array<i64: 8, 128>}, {transform_indices = @transform_3, window_bounds = array<i64: 1, 1, 128>}]} {
    %c0 = arith.constant 0 : index
    %c0_0 = arith.constant 0 : index
    %0 = vector.load %arg1[%c0, %c0_0] : memref<8x2xi32, #tpu.memory_space<vmem>>, vector<8x1xi32>
    %c0_1 = arith.constant 0 : index
    %c1 = arith.constant 1 : index
    %1 = vector.load %arg1[%c0_1, %c1] : memref<8x2xi32, #tpu.memory_space<vmem>>, vector<8x1xi32>
    %2 = tpu.iota {dimensions = array<i32: 1>} : vector<8x128xi32>
    %3 = vector.broadcast %0 : vector<8x1xi32> to vector<8x128xi32>
    %4 = arith.cmpi eq, %3, %2 : vector<8x128xi32>
    %5 = arith.extui %4 : vector<8x128xi1> to vector<8x128xi32>
    %6 = arith.sitofp %5 : vector<8x128xi32> to vector<8x128xf32>
    %c0_2 = arith.constant 0 : index
    %c0_3 = arith.constant 0 : index
    %7 = vector.load %arg2[%c0_2, %c0_3] : memref<128x128xf32, #tpu.memory_space<vmem>>, vector<128x128xf32>
    %cst = arith.constant dense<0.000000e+00> : vector<8x128xf32>
    %8 = tpu.matmul %6, %7, %cst {dimension_numbers = #tpu.dot_dimension_numbers<[1], [0], [0], [1], [0, 0, 1, 1], [], []>} : vector<8x128xf32>, vector<128x128xf32>, vector<8x128xf32> -> vector<8x128xf32>
    %c65_i32 = arith.constant 65 : i32
    %9 = vector.broadcast %c65_i32 : i32 to vector<8x128xi32>
    %10 = arith.cmpi slt, %2, %9 : vector<8x128xi32>
    %cst_4 = arith.constant -1.000000e+30 : f32
    %11 = vector.broadcast %cst_4 : f32 to vector<8x128xf32>
    %12 = arith.select %10, %8, %11 : vector<8x128xi1>, vector<8x128xf32>
    %cst_5 = arith.constant dense<0xFF800000> : vector<8xf32>
    %13 = vector.multi_reduction <maximumf>, %12, %cst_5 [1] : vector<8x128xf32> to vector<8xf32>
    %14 = vector.shape_cast %13 : vector<8xf32> to vector<8x1xf32>
    %15 = vector.broadcast %14 : vector<8x1xf32> to vector<8x128xf32>
    %16 = arith.subf %12, %15 : vector<8x128xf32>
    %17 = math.exp %16 : vector<8x128xf32>
    %cst_6 = arith.constant dense<0.000000e+00> : vector<8xf32>
    %18 = vector.multi_reduction <add>, %17, %cst_6 [1] : vector<8x128xf32> to vector<8xf32>
    %19 = vector.shape_cast %18 : vector<8xf32> to vector<8x1xf32>
    %20 = math.log %19 : vector<8x1xf32>
    %21 = arith.addf %20, %14 : vector<8x1xf32>
    %22 = vector.broadcast %1 : vector<8x1xi32> to vector<8x128xi32>
    %23 = arith.cmpi eq, %22, %2 : vector<8x128xi32>
    %24 = arith.extui %23 : vector<8x128xi1> to vector<8x128xi32>
    %25 = arith.sitofp %24 : vector<8x128xi32> to vector<8x128xf32>
    %26 = arith.mulf %25, %8 : vector<8x128xf32>
    %cst_7 = arith.constant dense<0.000000e+00> : vector<8xf32>
    %27 = vector.multi_reduction <add>, %26, %cst_7 [1] : vector<8x128xf32> to vector<8xf32>
    %28 = vector.shape_cast %27 : vector<8xf32> to vector<8x1xf32>
    %c8_i32 = arith.constant 8 : i32
    %29 = arith.muli %arg0, %c8_i32 : i32
    %30 = tpu.iota {dimensions = array<i32: 0>} : vector<8x1xi32>
    %31 = vector.broadcast %29 : i32 to vector<8x1xi32>
    %32 = arith.addi %31, %30 : vector<8x1xi32>
    %33 = arith.subf %21, %28 : vector<8x1xf32>
    %c16_i32 = arith.constant 16 : i32
    %34 = vector.broadcast %c16_i32 : i32 to vector<8x1xi32>
    %35 = arith.cmpi slt, %32, %34 : vector<8x1xi32>
    %36 = arith.extui %35 : vector<8x1xi1> to vector<8x1xi32>
    %37 = arith.sitofp %36 : vector<8x1xi32> to vector<8x1xf32>
    %38 = arith.mulf %33, %37 : vector<8x1xf32>
    %39 = vector.shape_cast %38 : vector<8x1xf32> to vector<1x8x1xf32>
    %cst_8 = arith.constant dense<0.000000e+00> : vector<1xf32>
    %40 = vector.multi_reduction <add>, %39, %cst_8 [1, 2] : vector<1x8x1xf32> to vector<1xf32>
    %41 = vector.shape_cast %40 : vector<1xf32> to vector<1x1x1xf32>
    %42 = vector.extract %41[0, 0, 0] : f32 from vector<1x1x1xf32>
    %c0_9 = arith.constant 0 : index
    %c0_10 = arith.constant 0 : index
    %43 = vector.load %arg3[%c0_9, %c0_10] : memref<8x128xf32, #tpu.memory_space<vmem>>, vector<8x128xf32>
    tpu.vector_store %arg3[%c0_9, %c0_10], %8 {strides = array<i32>} : memref<8x128xf32, #tpu.memory_space<vmem>>, vector<8x128xf32>,
    %44 = vector.broadcast %42 : f32 to vector<1x1x128xf32>
    %c0_11 = arith.constant 0 : index
    %c0_12 = arith.constant 0 : index
    %c0_13 = arith.constant 0 : index
    %45 = vector.load %arg4[%c0_11, %c0_12, %c0_13] : memref<1x1x128xf32, #tpu.memory_space<vmem>>, vector<1x1x128xf32>
    tpu.vector_store %arg4[%c0_11, %c0_12, %c0_13], %44 {strides = array<i32>} : memref<1x1x128xf32, #tpu.memory_space<vmem>>, vector<1x1x128xf32>,
    return
  }
  func.func @transform_0(%arg0: i32) -> (i32, i32) {
    %c0_i32 = arith.constant 0 : i32
    %c0_i32_0 = arith.constant 0 : i32
    return %arg0, %c0_i32 : i32, i32
  }
  func.func @transform_1(%arg0: i32) -> (i32, i32) {
    %c0_i32 = arith.constant 0 : i32
    %c0_i32_0 = arith.constant 0 : i32
    %c0_i32_1 = arith.constant 0 : i32
    return %c0_i32, %c0_i32_0 : i32, i32
  }
  func.func @transform_2(%arg0: i32) -> (i32, i32) {
    %c0_i32 = arith.constant 0 : i32
    %c0_i32_0 = arith.constant 0 : i32
    return %arg0, %c0_i32 : i32, i32
  }
  func.func @transform_3(%arg0: i32) -> (i32, i32, i32) {
    %c0_i32 = arith.constant 0 : i32
    %c0_i32_0 = arith.constant 0 : i32
    %c0_i32_1 = arith.constant 0 : i32
    return %arg0, %c0_i32, %c0_i32_0 : i32, i32, i32
  }
}

</mosaic_0001>

<llo_original>
// kernel: tpu_custom_call.1
$region0: #{tpu_custom_call.1}
  #allocation0 [shape = 'u32[]', space=smem, size = 0x4, offset = 0x4, fixed_abs, tag = 'smem constant byte address 0x4 - core index']
  #allocation1 [shape = 'u32[144,128]{1,0:T(1,128)}', space=vmem, size = 0x12000, scoped, tag = 'internal scratch']
  %s0 = inlined_call_operand.vmem [shape: s32[16,2], index: 0, kind: input, shape index: {}]
  %s1 = inlined_call_operand.hbm [shape: f32[128,128], index: 1, kind: input, shape index: {}]
  %s2 = inlined_call_operand.hbm [shape: f32[16,128], index: 2, kind: output, shape index: {0}]
  %s3 = inlined_call_operand.hbm [shape: f32[2,1,128], index: 3, kind: output, shape index: {1}]
  %4 = xla_tuple %s2, %s3
  %s5 = sld [smem:[#allocation0]]
  $region53: #{tpu_custom_call.1} parent=0
    _
  %s7 = ssub.s32 1, %s5
  %s8 = scalar_select 0, %s7, %s5
  $region1: #{tpu_custom_call.1} parent=0
    #allocation2 [shape = 'u8[65536]{0}', space=vmem, size = 0x10000, scoped, tag = 'input window, operand 1, single buffered']
    #allocation3 [shape = 's32[2]{0}', space=sflag, size = 0x8, scoped, tag = 'scoped memory for tpu_custom_call.1']
    #allocation4 [shape = 's32[2]{0}', space=sflag, size = 0x8, scoped, tag = 'scoped memory for tpu_custom_call.1']
    #allocation5 [shape = 'u8[8192]{0}', space=vmem, size = 0x2000, scoped, tag = 'output window, operand 0']
    #allocation6 [shape = 'u8[1024]{0}', space=vmem, size = 0x400, scoped, tag = 'output window, operand 1']
    #allocation7 [shape = 's32[2]{0}', space=sflag, size = 0x8, scoped, tag = 'scoped memory for tpu_custom_call.1']
    %9 = vsyncpa [#allocation3], 0
    %10 = vsyncpa [#allocation4], 0
    %s11 = scalar_lea.sflag [#allocation4], 1
    %12 = vsyncpa %s11, 0
    %13 = vsyncpa [#allocation7], 0
    %s14 = scalar_lea.sflag [#allocation7], 1
    %15 = vsyncpa %s14, 0
    loop: start=0, step=1, limit=4
    $region2: #{tpu_custom_call.1} parent=1 // loop_pre_header
      _
    $region3: #{tpu_custom_call.1} parent=1 // loop_header
      %s17 = sphi 0, %s21
      %p18 = scmp.ge.s32.totalorder %s17, 4
      %s27 = sphi 0, %s29
      %s30 = sphi 0, %s27
      %s31 = sphi 0, %s30
      %s47 = sphi 0, %s31
      %s51 = sphi 0, %s51
      %s53 = sphi 0, %s51
      %s54 = sphi 0, %s53
      %s68 = sphi 0, %s54
      %s74 = sphi 0, %s76
      %s77 = sphi 0, %s74
      %s78 = sphi 0, %s77
      %s94 = sphi 0, %s78
      %s100 = sphi 0, %s102
      %s103 = sphi 0, %s100
      %s104 = sphi 0, %s103
      %s120 = sphi 0, %s104
    $region4: #{tpu_custom_call.1} parent=1 // loop_header_branch
      %20 = sbr.rel (%p18) target = $region8
    $region5: #{tpu_custom_call.1} parent=1 // loop_body
      %s22 = ssub.s32 %s17, 1
      %s23 = ssub.s32 %s17, 2
      %s24 = sadd.s32 %s17, 1
      %s25 = ssub.s32 %s17, %s24
      %p26 = scmp.eq.s32.totalorder %s25, 0
      %s28 = sadd.s32 %s27, 1
      %s29 = scalar_select %p26, %s27, %s28
      %p32 = pneg %p26
      %p33 = scmp.eq.s32.totalorder %s17, 1
      %p34 = por %p32, %p33
      %p35 = scmp.ne.s32.totalorder %s27, %s30
      %p36 = scmp.eq.s32.totalorder %s17, 0
      %p37 = por %p35, %p36
      %p38 = scmp.ne.s32.totalorder %s27, %s30
      %p39 = scmp.eq.s32.totalorder %s22, 1
      %p40 = por %p38, %p39
      %p41 = scmp.ne.s32.totalorder %s30, %s31
      %p42 = scmp.eq.s32.totalorder %s22, 0
      %p43 = por %p41, %p42
      %p44 = scmp.ne.s32.totalorder %s30, %s31
      %p45 = scmp.eq.s32.totalorder %s23, 1
      %p46 = por %p44, %p45
      %p48 = scmp.ne.s32.totalorder %s31, %s47
      %p49 = scmp.eq.s32.totalorder %s23, 0
      %p50 = por %p48, %p49
      %s52 = sadd.s32 %s51, 1
      %p55 = scmp.eq.s32.totalorder %s17, 1
      %p56 = scmp.ne.s32.totalorder %s51, %s53
      %p57 = scmp.eq.s32.totalorder %s17, 0
      %p58 = por %p56, %p57
      %p59 = scmp.ne.s32.totalorder %s51, %s53
      %p60 = scmp.eq.s32.totalorder %s22, 1
      %p61 = por %p59, %p60
      %p62 = scmp.ne.s32.totalorder %s53, %s54
      %p63 = scmp.eq.s32.totalorder %s22, 0
      %p64 = por %p62, %p63
      %p65 = scmp.ne.s32.totalorder %s53, %s54
      %p66 = scmp.eq.s32.totalorder %s23, 1
      %p67 = por %p65, %p66
      %p69 = scmp.ne.s32.totalorder %s54, %s68
      %p70 = scmp.eq.s32.totalorder %s23, 0
      %p71 = por %p69, %p70
      %s72 = ssub.s32 %s17, %s24
      %p73 = scmp.eq.s32.totalorder %s72, 0
      %s75 = sadd.s32 %s74, 1
      %s76 = scalar_select %p73, %s74, %s75
      %p79 = pneg %p73
      %p80 = scmp.eq.s32.totalorder %s17, 1
      %p81 = por %p79, %p80
      %p82 = scmp.ne.s32.totalorder %s74, %s77
      %p83 = scmp.eq.s32.totalorder %s17, 0
      %p84 = por %p82, %p83
      %p85 = scmp.ne.s32.totalorder %s74, %s77
      %p86 = scmp.eq.s32.totalorder %s22, 1
      %p87 = por %p85, %p86
      %p88 = scmp.ne.s32.totalorder %s77, %s78
      %p89 = scmp.eq.s32.totalorder %s22, 0
      %p90 = por %p88, %p89
      %p91 = scmp.ne.s32.totalorder %s77, %s78
      %p92 = scmp.eq.s32.totalorder %s23, 1
      %p93 = por %p91, %p92
      %p95 = scmp.ne.s32.totalorder %s78, %s94
      %p96 = scmp.eq.s32.totalorder %s23, 0
      %p97 = por %p95, %p96
      %s98 = ssub.s32 %s17, %s24
      %p99 = scmp.eq.s32.totalorder %s98, 0
      %s101 = sadd.s32 %s100, 1
      %s102 = scalar_select %p99, %s100, %s101
      %p105 = pneg %p99
      %p106 = scmp.eq.s32.totalorder %s17, 1
      %p107 = por %p105, %p106
      %p108 = scmp.ne.s32.totalorder %s100, %s103
      %p109 = scmp.eq.s32.totalorder %s17, 0
      %p110 = por %p108, %p109
      %p111 = scmp.ne.s32.totalorder %s100, %s103
      %p112 = scmp.eq.s32.totalorder %s22, 1
      %p113 = por %p111, %p112
      %p114 = scmp.ne.s32.totalorder %s103, %s104
      %p115 = scmp.eq.s32.totalorder %s22, 0
      %p116 = por %p114, %p115
      %p117 = scmp.ne.s32.totalorder %s103, %s104
      %p118 = scmp.eq.s32.totalorder %s23, 1
      %p119 = por %p117, %p118
      %p121 = scmp.ne.s32.totalorder %s104, %s120
      %p122 = scmp.eq.s32.totalorder %s23, 0
      %p123 = por %p121, %p122
      %p124 = scmp.le.s32.totalorder 1, %s17
      %p125 = scmp.lt.s32.totalorder %s17, 3
      %p126 = pnand %p124, %p125
      %p127 = pneg %p126
      // Predicated region
      $region9: #{tpu_custom_call.1} parent=5 // pred_check
        _
      $region10: #{tpu_custom_call.1} parent=5 // pred_check_branch
        %129 = sbr.rel (%p126) target = $region12
      $region11: #{tpu_custom_call.1} parent=5 // pred_region
        %s130 = ssub.s32 %s17, 1
        // Predicated region
        $region13: #{tpu_custom_call.1} parent=11 // pred_check
          %p131 = pneg %p64
        $region14: #{tpu_custom_call.1} parent=11 // pred_check_branch
          %133 = sbr.rel (%p131) target = $region16
        $region15: #{tpu_custom_call.1} parent=11 // pred_region
          %s135 = ssub.s32 2048, 2048
          %136 = vsyncadd [#allocation3], %s135
          %s137 = sshll.u32 [#allocation2], 4
          %s138 = int_to_ptr.vmem [resolvable:$true] %s137
          %143 = dma.hbm_to_vmem [thread:$0]  %s1, 2048, %s138, [#allocation3], 128, 128, 8
        $region16: #{tpu_custom_call.1} parent=11 // pred_fallthru
          _
      $region12: #{tpu_custom_call.1} parent=5 // pred_fallthru
        _
      %p144 = scmp.lt.s32.totalorder %s17, 2
      // Predicated region
      $region17: #{tpu_custom_call.1} parent=5 // pred_check
        %p145 = pneg %p144
      $region18: #{tpu_custom_call.1} parent=5 // pred_check_branch
        %147 = sbr.rel (%p145) target = $region20
      $region19: #{tpu_custom_call.1} parent=5 // pred_region
        // Predicated region
        $region21: #{tpu_custom_call.1} parent=19 // pred_check
          %p148 = pneg %p37
        $region22: #{tpu_custom_call.1} parent=19 // pred_check_branch
          %150 = sbr.rel (%p148) target = $region24
        $region23: #{tpu_custom_call.1} parent=19 // pred_region
          %p151 = scmp.lt.s32.totalorder %s17, 1
          %s152 = scalar_select %p151, %s17, 1
          %s153 = smul.addr %s152, 8
          %s154 = scalar_lea.vmem %s0, %s153
        $region24: #{tpu_custom_call.1} parent=19 // pred_fallthru
          _
      $region20: #{tpu_custom_call.1} parent=5 // pred_fallthru
        _
      %p155 = scmp.le.s32.totalorder 1, %s17
      %p156 = scmp.lt.s32.totalorder %s17, 3
      %p157 = pnand %p155, %p156
      %p158 = pneg %p157
      // Predicated region
      $region25: #{tpu_custom_call.1} parent=5 // pred_check
        _
      $region26: #{tpu_custom_call.1} parent=5 // pred_check_branch
        %160 = sbr.rel (%p157) target = $region28
      $region27: #{tpu_custom_call.1} parent=5 // pred_region
        %s161 = ssub.s32 %s17, 1
        // Predicated region
        $region29: #{tpu_custom_call.1} parent=27 // pred_check
          %p162 = pneg %p64
        $region30: #{tpu_custom_call.1} parent=27 // pred_check_branch
          %164 = sbr.rel (%p162) target = $region32
        $region31: #{tpu_custom_call.1} parent=27 // pred_region
          %165 = dma.done [#allocation3], 2048
        $region32: #{tpu_custom_call.1} parent=27 // pred_fallthru
          _
        %p166 = scmp.lt.s32.totalorder %s22, 1
        %s167 = scalar_select %p166, %s22, 1
        %s168 = smul.addr %s167, 8
        %s169 = scalar_lea.vmem %s0, %s168
        %p170 = pneg %p43
        %p171 = pneg %p40
        %p172 = pneg %p64
        %p173 = pneg %p61
        %p174 = pneg %p90
        %p175 = pneg %p87
        %s176 = sand.u32 %s77, 1
        %s177 = scalar_lea.sflag [#allocation4], %s176
        %s178 = sand.u32 %s77, 1
        %s179 = smul.addr %s178, 8
        %s180 = scalar_lea.vmem [#allocation5], %s179
        %p181 = pneg %p116
        %p182 = pneg %p113
        %s183 = sand.u32 %s103, 1
        %s184 = scalar_lea.sflag [#allocation7], %s183
        %s185 = sand.u32 %s103, 1
        %s186 = scalar_lea.vmem [#allocation6], %s185
        %p187 = scmp.lt.s32.totalorder %s22, 1
        %s188 = scalar_select %p187, %s22, 1
        %s189 = smul.addr %s188, 8
        %s190 = scalar_lea.vmem %s0, %s189
        %v191 = vld [vmem:[%s190] sm:$0xff]
        %v192 = vlaneseq
        %v193 = vand.u32 %v192, 127
        %194 = vset.pattern.permute.xlu0 0
        %195 = vperm.xlu0 %194, %v191
        %v196 = vpop.permute.xlu0 %195
        %vm197 = vcmp.eq.s32.totalorder %v196, %v193
        %v198 = vsel %vm197, 1, 0
        %v199 = vcvt.s32.f32 %v198
        %v200 = vld [vmem:[#allocation2] sm:$0xff]
        %v201 = vld [vmem:[#allocation2 + $0x8] sm:$0xff]
        %v202 = vld [vmem:[#allocation2 + $0x10] sm:$0xff]
        %v203 = vld [vmem:[#allocation2 + $0x18] sm:$0xff]
        %v204 = vld [vmem:[#allocation2 + $0x20] sm:$0xff]
        %v205 = vld [vmem:[#allocation2 + $0x28] sm:$0xff]
        %v206 = vld [vmem:[#allocation2 + $0x30] sm:$0xff]
        %v207 = vld [vmem:[#allocation2 + $0x38] sm:$0xff]
        %v208 = vld [vmem:[#allocation2 + $0x40] sm:$0xff]
        %v209 = vld [vmem:[#allocation2 + $0x48] sm:$0xff]
        %v210 = vld [vmem:[#allocation2 + $0x50] sm:$0xff]
        %v211 = vld [vmem:[#allocation2 + $0x58] sm:$0xff]
        %v212 = vld [vmem:[#allocation2 + $0x60] sm:$0xff]
        %v213 = vld [vmem:[#allocation2 + $0x68] sm:$0xff]
        %v214 = vld [vmem:[#allocation2 + $0x70] sm:$0xff]
        %v215 = vld [vmem:[#allocation2 + $0x78] sm:$0xff]
        %216 = vmatprep.subr.mxu0 0.0
        %217 = vmatpush1.msra.mxu0 %v200
        %218 = vmatprep.subr.mxu0 0.0
        %219 = vmatpush1.msra.mxu0 %v201
        %220 = vmatprep.subr.mxu0 0.0
        %221 = vmatpush1.msra.mxu0 %v202
        %222 = vmatprep.subr.mxu0 0.0
        %223 = vmatpush1.msra.mxu0 %v203
        %224 = vmatprep.subr.mxu0 0.0
        %225 = vmatpush1.msra.mxu0 %v204
        %226 = vmatprep.subr.mxu0 0.0
        %227 = vmatpush1.msra.mxu0 %v205
        %228 = vmatprep.subr.mxu0 0.0
        %229 = vmatpush1.msra.mxu0 %v206
        %230 = vmatprep.subr.mxu0 0.0
        %231 = vmatpush1.msra.mxu0 %v207
        %232 = vmatprep.subr.mxu0 0.0
        %233 = vmatpush1.msra.mxu0 %v208
        %234 = vmatprep.subr.mxu0 0.0
        %235 = vmatpush1.msra.mxu0 %v209
        %236 = vmatprep.subr.mxu0 0.0
        %237 = vmatpush1.msra.mxu0 %v210
        %238 = vmatprep.subr.mxu0 0.0
        %239 = vmatpush1.msra.mxu0 %v211
        %240 = vmatprep.subr.mxu0 0.0
        %241 = vmatpush1.msra.mxu0 %v212
        %242 = vmatprep.subr.mxu0 0.0
        %243 = vmatpush1.msra.mxu0 %v213
        %244 = vmatprep.subr.mxu0 0.0
        %245 = vmatpush1.msra.mxu0 %v214
        %246 = vmatprep.subr.mxu0 0.0
        %247 = vmatpush1.msra.mxu0 %v215
        %248 = vmatprep.subr.mxu0 0.0
        %249 = vmatpush1.msra.mxu0 0.0
        %250 = vmatprep.subr.mxu0 0.0
        %251 = vmatpush1.msra.mxu0 0.0
        %252 = vmatprep.subr.mxu0 0.0
        %253 = vmatpush1.msra.mxu0 0.0
        %254 = vmatprep.subr.mxu0 0.0
        %255 = vmatpush1.msra.mxu0 0.0
        %256 = vmatprep.subr.mxu0 0.0
        %257 = vmatpush1.msra.mxu0 0.0
        %258 = vmatprep.subr.mxu0 0.0
        %259 = vmatpush1.msra.mxu0 0.0
        %260 = vmatprep.subr.mxu0 0.0
        %261 = vmatpush1.msra.mxu0 0.0
        %262 = vmatprep.subr.mxu0 0.0
        %263 = vmatpush1.msra.mxu0 0.0
        %264 = vmatprep.subr.mxu0 0.0
        %265 = vmatpush1.msra.mxu0 0.0
        %266 = vmatprep.subr.mxu0 0.0
        %267 = vmatpush1.msra.mxu0 0.0
        %268 = vmatprep.subr.mxu0 0.0
        %269 = vmatpush1.msra.mxu0 0.0
        %270 = vmatprep.subr.mxu0 0.0
        %271 = vmatpush1.msra.mxu0 0.0
        %272 = vmatprep.subr.mxu0 0.0
        %273 = vmatpush1.msra.mxu0 0.0
        %274 = vmatprep.subr.mxu0 0.0
        %275 = vmatpush1.msra.mxu0 0.0
        %276 = vmatprep.subr.mxu0 0.0
        %277 = vmatpush1.msra.mxu0 0.0
        %278 = vmatprep.subr.mxu0 0.0
        %279 = vmatpush1.msra.mxu0 0.0
        %280 = vmatprep.mubr.f32.mxu0 0.0
        %281 = vmatmul.mubr.f32.gmra.mrb[0].mxu0 %v199
        %v282 = vpop.f32.mrb[0].mxu0
        %v283 = vadd.f32 0.0, %v282
        %v284 = vpop.f32.mrb[0].mxu0
        %285 = vdwg.mxu0
        %vm286 = vcmp.lt.s32.totalorder %v193, 65
        %v287 = vsel %vm286, %v283, -1e+30
        %288 = vmax.xlane.f32.xlu0 %v287
        %v289 = vpop.xlane.xlu0 %288
        %v290 = vsub.f32 %v287, %v289
        %v291 = vmul.f32 %v290, 1.442695
        %v292 = vpow.pop %v291
        %293 = vadd.xlane.f32.xlu0 %v292
        %v294 = vpop.xlane.xlu0 %293
        %v295 = vlog2.pop %v294
        %v296 = vmul.f32 %v295, 0.6931472
        %v297 = vadd.f32 %v296, %v289
        %298 = vset.pattern.permute.xlu0 1
        %299 = vperm.xlu0 %298, %v191
        %v300 = vpop.permute.xlu0 %299
        %vm301 = vcmp.eq.s32.totalorder %v300, %v193
        %v302 = vsel %vm301, 1, 0
        %v303 = vcvt.s32.f32 %v302
        %v304 = vmul.f32 %v303, %v283
        %305 = vadd.xlane.f32.xlu0 %v304
        %v306 = vpop.xlane.xlu0 %305
        %s307 = smul.u32 %s22, 8
        %v308 = vlaneseq
        %v309 = vshrl.u32 %v308, 7
        %v310 = vstv %s307
        %v311 = vadd.s32 %v310, %v309
        %v312 = vsub.f32 %v297, %v306
        %vm313 = vcmp.lt.s32.totalorder %v311, 16
        %v314 = vsel %vm313, 1, 0
        %v315 = vcvt.s32.f32 %v314
        %v316 = vmul.f32 %v312, %v315
        %vm317 = vcmask 7168
        %v318 = vsel %vm317, %v316, 0.0
        %319 = vadd.xlane.f32.xlu0 %v318
        %v320 = vpop.xlane.xlu0 %319
        %v321 = vrot.slane %v320, 4
        %v322 = vadd.f32 %v320, %v321
        %v323 = vrot.slane %v322, 2
        %v324 = vadd.f32 %v322, %v323
        %v325 = vrot.slane %v324, 1
        %v326 = vadd.f32 %v324, %v325
        %s327 = vtos %v326
        %328 = vst [vmem:[%s180] sm:$0xff] %v283
        %v329 = vstv %s327
        %330 = vst [vmem:[%s186] sm:$0x1] %v329
        %s331 = sand.u32 %s77, 1
        %s332 = scalar_lea.sflag [#allocation4], %s331
        %s333 = sand.u32 %s77, 1
        %s334 = smul.addr %s333, 8
        %s335 = scalar_lea.vmem [#allocation5], %s334
        %s336 = sand.u32 %s103, 1
        %s337 = scalar_lea.sflag [#allocation7], %s336
        %s338 = sand.u32 %s103, 1
        %s339 = scalar_lea.vmem [#allocation6], %s338
        // Predicated region
        $region33: #{tpu_custom_call.1} parent=27 // pred_check
          %p340 = pneg %p87
        $region34: #{tpu_custom_call.1} parent=27 // pred_check_branch
          %342 = sbr.rel (%p340) target = $region36
        $region35: #{tpu_custom_call.1} parent=27 // pred_region
          %s344 = ssub.s32 128, 128
          %345 = vsyncadd %s332, %s344
          %s346 = smul.addr %s22, 128
          %s347 = scalar_lea.hbm %s2, %s346
          %s349 = sshll.u32 %s335, 4
          %s350 = int_to_ptr.vmem [resolvable:$true] %s349
          %352 = dma.vmem_to_hbm [thread:$0]  %s350, 128, %s347, %s332
        $region36: #{tpu_custom_call.1} parent=27 // pred_fallthru
          _
        // Predicated region
        $region37: #{tpu_custom_call.1} parent=27 // pred_check
          %p353 = pneg %p113
        $region38: #{tpu_custom_call.1} parent=27 // pred_check_branch
          %355 = sbr.rel (%p353) target = $region40
        $region39: #{tpu_custom_call.1} parent=27 // pred_region
          %s357 = ssub.s32 16, 16
          %358 = vsyncadd %s337, %s357
          %s359 = smul.addr %s22, 16
          %s360 = scalar_lea.hbm %s3, %s359
          %s362 = sshll.u32 %s339, 4
          %s363 = int_to_ptr.vmem [resolvable:$true] %s362
          %365 = dma.vmem_to_hbm [thread:$0]  %s363, 16, %s360, %s337
        $region40: #{tpu_custom_call.1} parent=27 // pred_fallthru
          _
      $region28: #{tpu_custom_call.1} parent=5 // pred_fallthru
        _
      %p366 = scmp.le.s32.totalorder 2, %s17
      // Predicated region
      $region41: #{tpu_custom_call.1} parent=5 // pred_check
        %p367 = pneg %p366
      $region42: #{tpu_custom_call.1} parent=5 // pred_check_branch
        %369 = sbr.rel (%p367) target = $region44
      $region43: #{tpu_custom_call.1} parent=5 // pred_region
        %s370 = ssub.s32 %s17, 2
        // Predicated region
        $region45: #{tpu_custom_call.1} parent=43 // pred_check
          %p371 = pneg %p93
        $region46: #{tpu_custom_call.1} parent=43 // pred_check_branch
          %373 = sbr.rel (%p371) target = $region48
        $region47: #{tpu_custom_call.1} parent=43 // pred_region
          %s374 = sand.u32 %s78, 1
          %s375 = scalar_lea.sflag [#allocation4], %s374
          %s376 = sand.u32 %s78, 1
          %s377 = smul.addr %s376, 8
          %s378 = scalar_lea.vmem [#allocation5], %s377
          %379 = dma.done %s375, 128
        $region48: #{tpu_custom_call.1} parent=43 // pred_fallthru
          _
        // Predicated region
        $region49: #{tpu_custom_call.1} parent=43 // pred_check
          %p380 = pneg %p119
        $region50: #{tpu_custom_call.1} parent=43 // pred_check_branch
          %382 = sbr.rel (%p380) target = $region52
        $region51: #{tpu_custom_call.1} parent=43 // pred_region
          %s383 = sand.u32 %s104, 1
          %s384 = scalar_lea.sflag [#allocation7], %s383
          %s385 = sand.u32 %s104, 1
          %s386 = scalar_lea.vmem [#allocation6], %s385
          %387 = dma.done %s384, 16
        $region52: #{tpu_custom_call.1} parent=43 // pred_fallthru
          _
      $region44: #{tpu_custom_call.1} parent=5 // pred_fallthru
        _
    $region6: #{tpu_custom_call.1} parent=1 // loop_footer
      %s21 = sadd.s32 1, %s17
    $region7: #{tpu_custom_call.1} parent=1 // loop_footer_branch
      %16 = sbr.rel target = $region3
    $region8: #{tpu_custom_call.1} parent=1 // loop_exit
      _
    %388 = vsyncpa [#allocation3], 1
    %s389 = scalar_lea.sflag [#allocation3], 1
    %390 = vsyncpa %s389, 1
    %391 = vsyncpa [#allocation4], 1
    %s392 = scalar_lea.sflag [#allocation4], 1
    %393 = vsyncpa %s392, 1
    %394 = vsyncpa [#allocation7], 1
    %s395 = scalar_lea.sflag [#allocation7], 1
    %396 = vsyncpa %s395, 1

</llo_original>
